<compile_context>
chip_gen: v7x
topology: tpu7x:2x2x1
jax: 0.10.0
libtpu: 0.0.40
codegen_flags: <defaults>
</compile_context>

<pallas_src>
import jax
import jax.numpy as jnp
from jax.experimental import pallas as pl
from jax.experimental.pallas import tpu as pltpu

N_IN, H1, H2, N_OUT = 8, 6, 4, 1


def _mlp_kernel(x_ref, w1_ref, b1_ref, w2_ref, b2_ref, w3_ref, b3_ref, o_ref):
    """Fused feature-major MLP.

    x_ref : (8, TILE_B) f32 VMEM tile, batch on lanes.
    w*/b* : SMEM scalar tables in PyTorch layout ((out, in) / (out,)).
    o_ref : (1, TILE_B) f32 VMEM tile (lane-dense output).
    """

    def layer(rows_in, w_ref, b_ref, n_out, n_in):
        # Unrolled scalar-broadcast FMAs across the batch-lane axis (pure VPU).
        rows_out = []
        for j in range(n_out):
            acc = rows_in[0] * w_ref[j, 0]
            for i in range(1, n_in):
                acc = acc + rows_in[i] * w_ref[j, i]
            rows_out.append(jax.nn.sigmoid(acc + b_ref[j]))
        return rows_out

    x_rows = [x_ref[i:i + 1, :] for i in range(N_IN)]        # 8 x (1, TILE_B)
    h1 = layer(x_rows, w1_ref, b1_ref, H1, N_IN)
    h2 = layer(h1, w2_ref, b2_ref, H2, H1)
    h3 = layer(h2, w3_ref, b3_ref, N_OUT, H2)
    o_ref[...] = h3[0].astype(o_ref.dtype)


def mlp_forward(x, params, *, tile_b=512):
    """x: (B, 8) float32.  params: PyTorch-layout w*: (out, in), b*: (out,).
    Returns (B, 1) float32."""
    B, f = x.shape
    assert f == N_IN
    assert tile_b % 128 == 0

    w1, b1 = params["w1"], params["b1"]
    w2, b2 = params["w2"], params["b2"]
    w3, b3 = params["w3"], params["b3"]

    # Feature-major: batch on the lane axis, padded to a lane/tile multiple.
    xt = x.T                                        # (8, B)
    pb = ((B + 127) // 128) * 128                   # lane multiple
    tb = min(tile_b, pb)
    pb = ((pb + tb - 1) // tb) * tb                 # tile multiple
    if pb != B:
        xt = jnp.pad(xt, ((0, 0), (0, pb - B)))

    smem = pl.BlockSpec(memory_space=pltpu.MemorySpace.SMEM)

    out = pl.pallas_call(
        _mlp_kernel,
        out_shape=jax.ShapeDtypeStruct((N_OUT, pb), x.dtype),
        grid_spec=pl.GridSpec(
            grid=(pb // tb,),
            in_specs=[
                pl.BlockSpec((N_IN, tb), lambda i: (0, i)),   # pipelined x tiles
                smem, smem, smem, smem, smem, smem,           # params resident in SMEM
            ],
            out_specs=pl.BlockSpec((N_OUT, tb), lambda i: (0, i)),
        ),
        compiler_params=pltpu.CompilerParams(
            dimension_semantics=("parallel",),                # megacore split (v7x)
        ),
    )(xt, w1, b1, w2, b2, w3, b3)

    return out[:, :B].T                              # back to (B, 1)


def init_params(key):
    """Deterministic init mirroring torch.nn.Linear default:
    U(-1/sqrt(fan_in), 1/sqrt(fan_in)); weights stored PyTorch-style (out, in)."""
    def linear(key, fan_in, fan_out):
        kw, kb = jax.random.split(key)
        bound = 1.0 / jnp.sqrt(float(fan_in))
        w = jax.random.uniform(kw, (fan_out, fan_in), jnp.float32, -bound, bound)
        b = jax.random.uniform(kb, (fan_out,), jnp.float32, -bound, bound)
        return w, b

    k1, k2, k3 = jax.random.split(key, 3)
    w1, b1 = linear(k1, N_IN, H1)
    w2, b2 = linear(k2, H1, H2)
    w3, b3 = linear(k3, H2, N_OUT)
    return {"w1": w1, "b1": b1, "w2": w2, "b2": b2, "w3": w3, "b3": b3}


def reference_forward(x, params):
    hi = jax.lax.Precision.HIGHEST
    h = jax.nn.sigmoid(jnp.dot(x, params["w1"].T, precision=hi) + params["b1"])
    h = jax.nn.sigmoid(jnp.dot(h, params["w2"].T, precision=hi) + params["b2"])
    h = jax.nn.sigmoid(jnp.dot(h, params["w3"].T, precision=hi) + params["b3"])
    return h


if __name__ == "__main__":
    key = jax.random.PRNGKey(0)
    kp, kx = jax.random.split(key)

    params = init_params(kp)
    B = 16
    x = jax.random.normal(kx, (B, N_IN), dtype=jnp.float32)

    out = jax.block_until_ready(mlp_forward(x, params))
    ref = reference_forward(x, params)

    assert out.shape == (B, 1), out.shape
    assert jnp.allclose(out, ref, atol=1e-5, rtol=1e-5), (
        f"mismatch vs reference, max abs err = {float(jnp.max(jnp.abs(out - ref)))}")

    print("KERNEL_OK")
</pallas_src>

<mosaic_0001>
module attributes {stable_mosaic.version = 11 : i64} {
  func.func @_mlp_kernel(%arg0: i32, %arg1: memref<8x128xf32, #tpu.memory_space<vmem>>, %arg2: memref<6x8xf32, #tpu.memory_space<smem>>, %arg3: memref<6xf32, #tpu.memory_space<smem>>, %arg4: memref<4x6xf32, #tpu.memory_space<smem>>, %arg5: memref<4xf32, #tpu.memory_space<smem>>, %arg6: memref<1x4xf32, #tpu.memory_space<smem>>, %arg7: memref<1xf32, #tpu.memory_space<smem>>, %arg8: memref<1x128xf32, #tpu.memory_space<vmem>>) attributes {dimension_semantics = [#tpu.dimension_semantics<parallel>], iteration_bounds = array<i64: 1>, scalar_prefetch = 0 : i64, scratch_operands = 0 : i64, tpu.core_type = #tpu.core_type<tc>, window_params = [{transform_indices = @transform_0, window_bounds = array<i64: 8, 128>}, {transform_indices = @transform_1, window_bounds = array<i64: 6, 8>}, {transform_indices = @transform_2, window_bounds = array<i64: 6>}, {transform_indices = @transform_3, window_bounds = array<i64: 4, 6>}, {transform_indices = @transform_4, window_bounds = array<i64: 4>}, {transform_indices = @transform_5, window_bounds = array<i64: 1, 4>}, {transform_indices = @transform_6, window_bounds = array<i64: 1>}, {transform_indices = @transform_7, window_bounds = array<i64: 1, 128>}]} {
    %c0 = arith.constant 0 : index
    %c0_0 = arith.constant 0 : index
    %0 = vector.load %arg1[%c0, %c0_0] : memref<8x128xf32, #tpu.memory_space<vmem>>, vector<1x128xf32>
    %c1 = arith.constant 1 : index
    %c0_1 = arith.constant 0 : index
    %1 = vector.load %arg1[%c1, %c0_1] : memref<8x128xf32, #tpu.memory_space<vmem>>, vector<1x128xf32>
    %c2 = arith.constant 2 : index
    %c0_2 = arith.constant 0 : index
    %2 = vector.load %arg1[%c2, %c0_2] : memref<8x128xf32, #tpu.memory_space<vmem>>, vector<1x128xf32>
    %c3 = arith.constant 3 : index
    %c0_3 = arith.constant 0 : index
    %3 = vector.load %arg1[%c3, %c0_3] : memref<8x128xf32, #tpu.memory_space<vmem>>, vector<1x128xf32>
    %c4 = arith.constant 4 : index
    %c0_4 = arith.constant 0 : index
    %4 = vector.load %arg1[%c4, %c0_4] : memref<8x128xf32, #tpu.memory_space<vmem>>, vector<1x128xf32>
    %c5 = arith.constant 5 : index
    %c0_5 = arith.constant 0 : index
    %5 = vector.load %arg1[%c5, %c0_5] : memref<8x128xf32, #tpu.memory_space<vmem>>, vector<1x128xf32>
    %c6 = arith.constant 6 : index
    %c0_6 = arith.constant 0 : index
    %6 = vector.load %arg1[%c6, %c0_6] : memref<8x128xf32, #tpu.memory_space<vmem>>, vector<1x128xf32>
    %c7 = arith.constant 7 : index
    %c0_7 = arith.constant 0 : index
    %7 = vector.load %arg1[%c7, %c0_7] : memref<8x128xf32, #tpu.memory_space<vmem>>, vector<1x128xf32>
    %c0_8 = arith.constant 0 : index
    %c0_9 = arith.constant 0 : index
    %8 = memref.load %arg2[%c0_8, %c0_9] : memref<6x8xf32, #tpu.memory_space<smem>>
    %9 = vector.broadcast %8 : f32 to vector<1x128xf32>
    %10 = arith.mulf %0, %9 : vector<1x128xf32>
    %c0_10 = arith.constant 0 : index
    %c1_11 = arith.constant 1 : index
    %11 = memref.load %arg2[%c0_10, %c1_11] : memref<6x8xf32, #tpu.memory_space<smem>>
    %12 = vector.broadcast %11 : f32 to vector<1x128xf32>
    %13 = arith.mulf %1, %12 : vector<1x128xf32>
    %14 = arith.addf %10, %13 : vector<1x128xf32>
    %c0_12 = arith.constant 0 : index
    %c2_13 = arith.constant 2 : index
    %15 = memref.load %arg2[%c0_12, %c2_13] : memref<6x8xf32, #tpu.memory_space<smem>>
    %16 = vector.broadcast %15 : f32 to vector<1x128xf32>
    %17 = arith.mulf %2, %16 : vector<1x128xf32>
    %18 = arith.addf %14, %17 : vector<1x128xf32>
    %c0_14 = arith.constant 0 : index
    %c3_15 = arith.constant 3 : index
    %19 = memref.load %arg2[%c0_14, %c3_15] : memref<6x8xf32, #tpu.memory_space<smem>>
    %20 = vector.broadcast %19 : f32 to vector<1x128xf32>
    %21 = arith.mulf %3, %20 : vector<1x128xf32>
    %22 = arith.addf %18, %21 : vector<1x128xf32>
    %c0_16 = arith.constant 0 : index
    %c4_17 = arith.constant 4 : index
    %23 = memref.load %arg2[%c0_16, %c4_17] : memref<6x8xf32, #tpu.memory_space<smem>>
    %24 = vector.broadcast %23 : f32 to vector<1x128xf32>
    %25 = arith.mulf %4, %24 : vector<1x128xf32>
    %26 = arith.addf %22, %25 : vector<1x128xf32>
    %c0_18 = arith.constant 0 : index
    %c5_19 = arith.constant 5 : index
    %27 = memref.load %arg2[%c0_18, %c5_19] : memref<6x8xf32, #tpu.memory_space<smem>>
    %28 = vector.broadcast %27 : f32 to vector<1x128xf32>
    %29 = arith.mulf %5, %28 : vector<1x128xf32>
    %30 = arith.addf %26, %29 : vector<1x128xf32>
    %c0_20 = arith.constant 0 : index
    %c6_21 = arith.constant 6 : index
    %31 = memref.load %arg2[%c0_20, %c6_21] : memref<6x8xf32, #tpu.memory_space<smem>>
    %32 = vector.broadcast %31 : f32 to vector<1x128xf32>
    %33 = arith.mulf %6, %32 : vector<1x128xf32>
    %34 = arith.addf %30, %33 : vector<1x128xf32>
    %c0_22 = arith.constant 0 : index
    %c7_23 = arith.constant 7 : index
    %35 = memref.load %arg2[%c0_22, %c7_23] : memref<6x8xf32, #tpu.memory_space<smem>>
    %36 = vector.broadcast %35 : f32 to vector<1x128xf32>
    %37 = arith.mulf %7, %36 : vector<1x128xf32>
    %38 = arith.addf %34, %37 : vector<1x128xf32>
    %c0_24 = arith.constant 0 : index
    %39 = memref.load %arg3[%c0_24] : memref<6xf32, #tpu.memory_space<smem>>
    %40 = vector.broadcast %39 : f32 to vector<1x128xf32>
    %41 = arith.addf %38, %40 : vector<1x128xf32>
    %42 = arith.negf %41 : vector<1x128xf32>
    %43 = math.exp %42 : vector<1x128xf32>
    %cst = arith.constant 1.000000e+00 : f32
    %44 = vector.broadcast %cst : f32 to vector<1x128xf32>
    %45 = arith.addf %44, %43 : vector<1x128xf32>
    %46 = arith.divf %44, %45 : vector<1x128xf32>
    %c1_25 = arith.constant 1 : index
    %c0_26 = arith.constant 0 : index
    %47 = memref.load %arg2[%c1_25, %c0_26] : memref<6x8xf32, #tpu.memory_space<smem>>
    %48 = vector.broadcast %47 : f32 to vector<1x128xf32>
    %49 = arith.mulf %0, %48 : vector<1x128xf32>
    %c1_27 = arith.constant 1 : index
    %c1_28 = arith.constant 1 : index
    %50 = memref.load %arg2[%c1_27, %c1_28] : memref<6x8xf32, #tpu.memory_space<smem>>
    %51 = vector.broadcast %50 : f32 to vector<1x128xf32>
    %52 = arith.mulf %1, %51 : vector<1x128xf32>
    %53 = arith.addf %49, %52 : vector<1x128xf32>
    %c1_29 = arith.constant 1 : index
    %c2_30 = arith.constant 2 : index
    %54 = memref.load %arg2[%c1_29, %c2_30] : memref<6x8xf32, #tpu.memory_space<smem>>
    %55 = vector.broadcast %54 : f32 to vector<1x128xf32>
    %56 = arith.mulf %2, %55 : vector<1x128xf32>
    %57 = arith.addf %53, %56 : vector<1x128xf32>
    %c1_31 = arith.constant 1 : index
    %c3_32 = arith.constant 3 : index
    %58 = memref.load %arg2[%c1_31, %c3_32] : memref<6x8xf32, #tpu.memory_space<smem>>
    %59 = vector.broadcast %58 : f32 to vector<1x128xf32>
    %60 = arith.mulf %3, %59 : vector<1x128xf32>
    %61 = arith.addf %57, %60 : vector<1x128xf32>
    %c1_33 = arith.constant 1 : index
    %c4_34 = arith.constant 4 : index
    %62 = memref.load %arg2[%c1_33, %c4_34] : memref<6x8xf32, #tpu.memory_space<smem>>
    %63 = vector.broadcast %62 : f32 to vector<1x128xf32>
    %64 = arith.mulf %4, %63 : vector<1x128xf32>
    %65 = arith.addf %61, %64 : vector<1x128xf32>
    %c1_35 = arith.constant 1 : index
    %c5_36 = arith.constant 5 : index
    %66 = memref.load %arg2[%c1_35, %c5_36] : memref<6x8xf32, #tpu.memory_space<smem>>
    %67 = vector.broadcast %66 : f32 to vector<1x128xf32>
    %68 = arith.mulf %5, %67 : vector<1x128xf32>
    %69 = arith.addf %65, %68 : vector<1x128xf32>
    %c1_37 = arith.constant 1 : index
    %c6_38 = arith.constant 6 : index
    %70 = memref.load %arg2[%c1_37, %c6_38] : memref<6x8xf32, #tpu.memory_space<smem>>
    %71 = vector.broadcast %70 : f32 to vector<1x128xf32>
    %72 = arith.mulf %6, %71 : vector<1x128xf32>
    %73 = arith.addf %69, %72 : vector<1x128xf32>
    %c1_39 = arith.constant 1 : index
    %c7_40 = arith.constant 7 : index
    %74 = memref.load %arg2[%c1_39, %c7_40] : memref<6x8xf32, #tpu.memory_space<smem>>
    %75 = vector.broadcast %74 : f32 to vector<1x128xf32>
    %76 = arith.mulf %7, %75 : vector<1x128xf32>
    %77 = arith.addf %73, %76 : vector<1x128xf32>
    %c1_41 = arith.constant 1 : index
    %78 = memref.load %arg3[%c1_41] : memref<6xf32, #tpu.memory_space<smem>>
    %79 = vector.broadcast %78 : f32 to vector<1x128xf32>
    %80 = arith.addf %77, %79 : vector<1x128xf32>
    %81 = arith.negf %80 : vector<1x128xf32>
    %82 = math.exp %81 : vector<1x128xf32>
    %cst_42 = arith.constant 1.000000e+00 : f32
    %83 = vector.broadcast %cst_42 : f32 to vector<1x128xf32>
    %84 = arith.addf %83, %82 : vector<1x128xf32>
    %85 = arith.divf %83, %84 : vector<1x128xf32>
    %c2_43 = arith.constant 2 : index
    %c0_44 = arith.constant 0 : index
    %86 = memref.load %arg2[%c2_43, %c0_44] : memref<6x8xf32, #tpu.memory_space<smem>>
    %87 = vector.broadcast %86 : f32 to vector<1x128xf32>
    %88 = arith.mulf %0, %87 : vector<1x128xf32>
    %c2_45 = arith.constant 2 : index
    %c1_46 = arith.constant 1 : index
    %89 = memref.load %arg2[%c2_45, %c1_46] : memref<6x8xf32, #tpu.memory_space<smem>>
    %90 = vector.broadcast %89 : f32 to vector<1x128xf32>
    %91 = arith.mulf %1, %90 : vector<1x128xf32>
    %92 = arith.addf %88, %91 : vector<1x128xf32>
    %c2_47 = arith.constant 2 : index
    %c2_48 = arith.constant 2 : index
    %93 = memref.load %arg2[%c2_47, %c2_48] : memref<6x8xf32, #tpu.memory_space<smem>>
    %94 = vector.broadcast %93 : f32 to vector<1x128xf32>
    %95 = arith.mulf %2, %94 : vector<1x128xf32>
    %96 = arith.addf %92, %95 : vector<1x128xf32>
    %c2_49 = arith.constant 2 : index
    %c3_50 = arith.constant 3 : index
    %97 = memref.load %arg2[%c2_49, %c3_50] : memref<6x8xf32, #tpu.memory_space<smem>>
    %98 = vector.broadcast %97 : f32 to vector<1x128xf32>
    %99 = arith.mulf %3, %98 : vector<1x128xf32>
    %100 = arith.addf %96, %99 : vector<1x128xf32>
    %c2_51 = arith.constant 2 : index
    %c4_52 = arith.constant 4 : index
    %101 = memref.load %arg2[%c2_51, %c4_52] : memref<6x8xf32, #tpu.memory_space<smem>>
    %102 = vector.broadcast %101 : f32 to vector<1x128xf32>
    %103 = arith.mulf %4, %102 : vector<1x128xf32>
    %104 = arith.addf %100, %103 : vector<1x128xf32>
    %c2_53 = arith.constant 2 : index
    %c5_54 = arith.constant 5 : index
    %105 = memref.load %arg2[%c2_53, %c5_54] : memref<6x8xf32, #tpu.memory_space<smem>>
    %106 = vector.broadcast %105 : f32 to vector<1x128xf32>
    %107 = arith.mulf %5, %106 : vector<1x128xf32>
    %108 = arith.addf %104, %107 : vector<1x128xf32>
    %c2_55 = arith.constant 2 : index
    %c6_56 = arith.constant 6 : index
    %109 = memref.load %arg2[%c2_55, %c6_56] : memref<6x8xf32, #tpu.memory_space<smem>>
    %110 = vector.broadcast %109 : f32 to vector<1x128xf32>
    %111 = arith.mulf %6, %110 : vector<1x128xf32>
    %112 = arith.addf %108, %111 : vector<1x128xf32>
    %c2_57 = arith.constant 2 : index
    %c7_58 = arith.constant 7 : index
    %113 = memref.load %arg2[%c2_57, %c7_58] : memref<6x8xf32, #tpu.memory_space<smem>>
    %114 = vector.broadcast %113 : f32 to vector<1x128xf32>
    %115 = arith.mulf %7, %114 : vector<1x128xf32>
    %116 = arith.addf %112, %115 : vector<1x128xf32>
    %c2_59 = arith.constant 2 : index
    %117 = memref.load %arg3[%c2_59] : memref<6xf32, #tpu.memory_space<smem>>
    %118 = vector.broadcast %117 : f32 to vector<1x128xf32>
    %119 = arith.addf %116, %118 : vector<1x128xf32>
    %120 = arith.negf %119 : vector<1x128xf32>
    %121 = math.exp %120 : vector<1x128xf32>
    %cst_60 = arith.constant 1.000000e+00 : f32
    %122 = vector.broadcast %cst_60 : f32 to vector<1x128xf32>
    %123 = arith.addf %122, %121 : vector<1x128xf32>
    %124 = arith.divf %122, %123 : vector<1x128xf32>
    %c3_61 = arith.constant 3 : index
    %c0_62 = arith.constant 0 : index
    %125 = memref.load %arg2[%c3_61, %c0_62] : memref<6x8xf32, #tpu.memory_space<smem>>
    %126 = vector.broadcast %125 : f32 to vector<1x128xf32>
    %127 = arith.mulf %0, %126 : vector<1x128xf32>
    %c3_63 = arith.constant 3 : index
    %c1_64 = arith.constant 1 : index
    %128 = memref.load %arg2[%c3_63, %c1_64] : memref<6x8xf32, #tpu.memory_space<smem>>
    %129 = vector.broadcast %128 : f32 to vector<1x128xf32>
    %130 = arith.mulf %1, %129 : vector<1x128xf32>
    %131 = arith.addf %127, %130 : vector<1x128xf32>
    %c3_65 = arith.constant 3 : index
    %c2_66 = arith.constant 2 : index
    %132 = memref.load %arg2[%c3_65, %c2_66] : memref<6x8xf32, #tpu.memory_space<smem>>
    %133 = vector.broadcast %132 : f32 to vector<1x128xf32>
    %134 = arith.mulf %2, %133 : vector<1x128xf32>
    %135 = arith.addf %131, %134 : vector<1x128xf32>
    %c3_67 = arith.constant 3 : index
    %c3_68 = arith.constant 3 : index
    %136 = memref.load %arg2[%c3_67, %c3_68] : memref<6x8xf32, #tpu.memory_space<smem>>
    %137 = vector.broadcast %136 : f32 to vector<1x128xf32>
    %138 = arith.mulf %3, %137 : vector<1x128xf32>
    %139 = arith.addf %135, %138 : vector<1x128xf32>
    %c3_69 = arith.constant 3 : index
    %c4_70 = arith.constant 4 : index
    %140 = memref.load %arg2[%c3_69, %c4_70] : memref<6x8xf32, #tpu.memory_space<smem>>
    %141 = vector.broadcast %140 : f32 to vector<1x128xf32>
    %142 = arith.mulf %4, %141 : vector<1x128xf32>
    %143 = arith.addf %139, %142 : vector<1x128xf32>
    %c3_71 = arith.constant 3 : index
    %c5_72 = arith.constant 5 : index
    %144 = memref.load %arg2[%c3_71, %c5_72] : memref<6x8xf32, #tpu.memory_space<smem>>
    %145 = vector.broadcast %144 : f32 to vector<1x128xf32>
    %146 = arith.mulf %5, %145 : vector<1x128xf32>
    %147 = arith.addf %143, %146 : vector<1x128xf32>
    %c3_73 = arith.constant 3 : index
    %c6_74 = arith.constant 6 : index
    %148 = memref.load %arg2[%c3_73, %c6_74] : memref<6x8xf32, #tpu.memory_space<smem>>
    %149 = vector.broadcast %148 : f32 to vector<1x128xf32>
    %150 = arith.mulf %6, %149 : vector<1x128xf32>
    %151 = arith.addf %147, %150 : vector<1x128xf32>
    %c3_75 = arith.constant 3 : index
    %c7_76 = arith.constant 7 : index
    %152 = memref.load %arg2[%c3_75, %c7_76] : memref<6x8xf32, #tpu.memory_space<smem>>
    %153 = vector.broadcast %152 : f32 to vector<1x128xf32>
    %154 = arith.mulf %7, %153 : vector<1x128xf32>
    %155 = arith.addf %151, %154 : vector<1x128xf32>
    %c3_77 = arith.constant 3 : index
    %156 = memref.load %arg3[%c3_77] : memref<6xf32, #tpu.memory_space<smem>>
    %157 = vector.broadcast %156 : f32 to vector<1x128xf32>
    %158 = arith.addf %155, %157 : vector<1x128xf32>
    %159 = arith.negf %158 : vector<1x128xf32>
    %160 = math.exp %159 : vector<1x128xf32>
    %cst_78 = arith.constant 1.000000e+00 : f32
    %161 = vector.broadcast %cst_78 : f32 to vector<1x128xf32>
    %162 = arith.addf %161, %160 : vector<1x128xf32>
    %163 = arith.divf %161, %162 : vector<1x128xf32>
    %c4_79 = arith.constant 4 : index
    %c0_80 = arith.constant 0 : index
    %164 = memref.load %arg2[%c4_79, %c0_80] : memref<6x8xf32, #tpu.memory_space<smem>>
    %165 = vector.broadcast %164 : f32 to vector<1x128xf32>
    %166 = arith.mulf %0, %165 : vector<1x128xf32>
    %c4_81 = arith.constant 4 : index
    %c1_82 = arith.constant 1 : index
    %167 = memref.load %arg2[%c4_81, %c1_82] : memref<6x8xf32, #tpu.memory_space<smem>>
    %168 = vector.broadcast %167 : f32 to vector<1x128xf32>
    %169 = arith.mulf %1, %168 : vector<1x128xf32>
    %170 = arith.addf %166, %169 : vector<1x128xf32>
    %c4_83 = arith.constant 4 : index
    %c2_84 = arith.constant 2 : index
    %171 = memref.load %arg2[%c4_83, %c2_84] : memref<6x8xf32, #tpu.memory_space<smem>>
    %172 = vector.broadcast %171 : f32 to vector<1x128xf32>
    %173 = arith.mulf %2, %172 : vector<1x128xf32>
    %174 = arith.addf %170, %173 : vector<1x128xf32>
    %c4_85 = arith.constant 4 : index
    %c3_86 = arith.constant 3 : index
    %175 = memref.load %arg2[%c4_85, %c3_86] : memref<6x8xf32, #tpu.memory_space<smem>>
    %176 = vector.broadcast %175 : f32 to vector<1x128xf32>
    %177 = arith.mulf %3, %176 : vector<1x128xf32>
    %178 = arith.addf %174, %177 : vector<1x128xf32>
    %c4_87 = arith.constant 4 : index
    %c4_88 = arith.constant 4 : index
    %179 = memref.load %arg2[%c4_87, %c4_88] : memref<6x8xf32, #tpu.memory_space<smem>>
    %180 = vector.broadcast %179 : f32 to vector<1x128xf32>
    %181 = arith.mulf %4, %180 : vector<1x128xf32>
    %182 = arith.addf %178, %181 : vector<1x128xf32>
    %c4_89 = arith.constant 4 : index
    %c5_90 = arith.constant 5 : index
    %183 = memref.load %arg2[%c4_89, %c5_90] : memref<6x8xf32, #tpu.memory_space<smem>>
    %184 = vector.broadcast %183 : f32 to vector<1x128xf32>
    %185 = arith.mulf %5, %184 : vector<1x128xf32>
    %186 = arith.addf %182, %185 : vector<1x128xf32>
    %c4_91 = arith.constant 4 : index
    %c6_92 = arith.constant 6 : index
    %187 = memref.load %arg2[%c4_91, %c6_92] : memref<6x8xf32, #tpu.memory_space<smem>>
    %188 = vector.broadcast %187 : f32 to vector<1x128xf32>
    %189 = arith.mulf %6, %188 : vector<1x128xf32>
    %190 = arith.addf %186, %189 : vector<1x128xf32>
    %c4_93 = arith.constant 4 : index
    %c7_94 = arith.constant 7 : index
    %191 = memref.load %arg2[%c4_93, %c7_94] : memref<6x8xf32, #tpu.memory_space<smem>>
    %192 = vector.broadcast %191 : f32 to vector<1x128xf32>
    %193 = arith.mulf %7, %192 : vector<1x128xf32>
    %194 = arith.addf %190, %193 : vector<1x128xf32>
    %c4_95 = arith.constant 4 : index
    %195 = memref.load %arg3[%c4_95] : memref<6xf32, #tpu.memory_space<smem>>
    %196 = vector.broadcast %195 : f32 to vector<1x128xf32>
    %197 = arith.addf %194, %196 : vector<1x128xf32>
    %198 = arith.negf %197 : vector<1x128xf32>
    %199 = math.exp %198 : vector<1x128xf32>
    %cst_96 = arith.constant 1.000000e+00 : f32
    %200 = vector.broadcast %cst_96 : f32 to vector<1x128xf32>
    %201 = arith.addf %200, %199 : vector<1x128xf32>
    %202 = arith.divf %200, %201 : vector<1x128xf32>
    %c5_97 = arith.constant 5 : index
    %c0_98 = arith.constant 0 : index
    %203 = memref.load %arg2[%c5_97, %c0_98] : memref<6x8xf32, #tpu.memory_space<smem>>
    %204 = vector.broadcast %203 : f32 to vector<1x128xf32>
    %205 = arith.mulf %0, %204 : vector<1x128xf32>
    %c5_99 = arith.constant 5 : index
    %c1_100 = arith.constant 1 : index
    %206 = memref.load %arg2[%c5_99, %c1_100] : memref<6x8xf32, #tpu.memory_space<smem>>
    %207 = vector.broadcast %206 : f32 to vector<1x128xf32>
    %208 = arith.mulf %1, %207 : vector<1x128xf32>
    %209 = arith.addf %205, %208 : vector<1x128xf32>
    %c5_101 = arith.constant 5 : index
    %c2_102 = arith.constant 2 : index
    %210 = memref.load %arg2[%c5_101, %c2_102] : memref<6x8xf32, #tpu.memory_space<smem>>
    %211 = vector.broadcast %210 : f32 to vector<1x128xf32>
    %212 = arith.mulf %2, %211 : vector<1x128xf32>
    %213 = arith.addf %209, %212 : vector<1x128xf32>
    %c5_103 = arith.constant 5 : index
    %c3_104 = arith.constant 3 : index
    %214 = memref.load %arg2[%c5_103, %c3_104] : memref<6x8xf32, #tpu.memory_space<smem>>
    %215 = vector.broadcast %214 : f32 to vector<1x128xf32>
    %216 = arith.mulf %3, %215 : vector<1x128xf32>
    %217 = arith.addf %213, %216 : vector<1x128xf32>
    %c5_105 = arith.constant 5 : index
    %c4_106 = arith.constant 4 : index
    %218 = memref.load %arg2[%c5_105, %c4_106] : memref<6x8xf32, #tpu.memory_space<smem>>
    %219 = vector.broadcast %218 : f32 to vector<1x128xf32>
    %220 = arith.mulf %4, %219 : vector<1x128xf32>
    %221 = arith.addf %217, %220 : vector<1x128xf32>
    %c5_107 = arith.constant 5 : index
    %c5_108 = arith.constant 5 : index
    %222 = memref.load %arg2[%c5_107, %c5_108] : memref<6x8xf32, #tpu.memory_space<smem>>
    %223 = vector.broadcast %222 : f32 to vector<1x128xf32>
    %224 = arith.mulf %5, %223 : vector<1x128xf32>
    %225 = arith.addf %221, %224 : vector<1x128xf32>
    %c5_109 = arith.constant 5 : index
    %c6_110 = arith.constant 6 : index
    %226 = memref.load %arg2[%c5_109, %c6_110] : memref<6x8xf32, #tpu.memory_space<smem>>
    %227 = vector.broadcast %226 : f32 to vector<1x128xf32>
    %228 = arith.mulf %6, %227 : vector<1x128xf32>
    %229 = arith.addf %225, %228 : vector<1x128xf32>
    %c5_111 = arith.constant 5 : index
    %c7_112 = arith.constant 7 : index
    %230 = memref.load %arg2[%c5_111, %c7_112] : memref<6x8xf32, #tpu.memory_space<smem>>
    %231 = vector.broadcast %230 : f32 to vector<1x128xf32>
    %232 = arith.mulf %7, %231 : vector<1x128xf32>
    %233 = arith.addf %229, %232 : vector<1x128xf32>
    %c5_113 = arith.constant 5 : index
    %234 = memref.load %arg3[%c5_113] : memref<6xf32, #tpu.memory_space<smem>>
    %235 = vector.broadcast %234 : f32 to vector<1x128xf32>
    %236 = arith.addf %233, %235 : vector<1x128xf32>
    %237 = arith.negf %236 : vector<1x128xf32>
    %238 = math.exp %237 : vector<1x128xf32>
    %cst_114 = arith.constant 1.000000e+00 : f32
    %239 = vector.broadcast %cst_114 : f32 to vector<1x128xf32>
    %240 = arith.addf %239, %238 : vector<1x128xf32>
    %241 = arith.divf %239, %240 : vector<1x128xf32>
    %c0_115 = arith.constant 0 : index
    %c0_116 = arith.constant 0 : index
    %242 = memref.load %arg4[%c0_115, %c0_116] : memref<4x6xf32, #tpu.memory_space<smem>>
    %243 = vector.broadcast %242 : f32 to vector<1x128xf32>
    %244 = arith.mulf %46, %243 : vector<1x128xf32>
    %c0_117 = arith.constant 0 : index
    %c1_118 = arith.constant 1 : index
    %245 = memref.load %arg4[%c0_117, %c1_118] : memref<4x6xf32, #tpu.memory_space<smem>>
    %246 = vector.broadcast %245 : f32 to vector<1x128xf32>
    %247 = arith.mulf %85, %246 : vector<1x128xf32>
    %248 = arith.addf %244, %247 : vector<1x128xf32>
    %c0_119 = arith.constant 0 : index
    %c2_120 = arith.constant 2 : index
    %249 = memref.load %arg4[%c0_119, %c2_120] : memref<4x6xf32, #tpu.memory_space<smem>>
    %250 = vector.broadcast %249 : f32 to vector<1x128xf32>
    %251 = arith.mulf %124, %250 : vector<1x128xf32>
    %252 = arith.addf %248, %251 : vector<1x128xf32>
    %c0_121 = arith.constant 0 : index
    %c3_122 = arith.constant 3 : index
    %253 = memref.load %arg4[%c0_121, %c3_122] : memref<4x6xf32, #tpu.memory_space<smem>>
    %254 = vector.broadcast %253 : f32 to vector<1x128xf32>
    %255 = arith.mulf %163, %254 : vector<1x128xf32>
    %256 = arith.addf %252, %255 : vector<1x128xf32>
    %c0_123 = arith.constant 0 : index
    %c4_124 = arith.constant 4 : index
    %257 = memref.load %arg4[%c0_123, %c4_124] : memref<4x6xf32, #tpu.memory_space<smem>>
    %258 = vector.broadcast %257 : f32 to vector<1x128xf32>
    %259 = arith.mulf %202, %258 : vector<1x128xf32>
    %260 = arith.addf %256, %259 : vector<1x128xf32>
    %c0_125 = arith.constant 0 : index
    %c5_126 = arith.constant 5 : index
    %261 = memref.load %arg4[%c0_125, %c5_126] : memref<4x6xf32, #tpu.memory_space<smem>>
    %262 = vector.broadcast %261 : f32 to vector<1x128xf32>
    %263 = arith.mulf %241, %262 : vector<1x128xf32>
    %264 = arith.addf %260, %263 : vector<1x128xf32>
    %c0_127 = arith.constant 0 : index
    %265 = memref.load %arg5[%c0_127] : memref<4xf32, #tpu.memory_space<smem>>
    %266 = vector.broadcast %265 : f32 to vector<1x128xf32>
    %267 = arith.addf %264, %266 : vector<1x128xf32>
    %268 = arith.negf %267 : vector<1x128xf32>
    %269 = math.exp %268 : vector<1x128xf32>
    %cst_128 = arith.constant 1.000000e+00 : f32
    %270 = vector.broadcast %cst_128 : f32 to vector<1x128xf32>
    %271 = arith.addf %270, %269 : vector<1x128xf32>
    %272 = arith.divf %270, %271 : vector<1x128xf32>
    %c1_129 = arith.constant 1 : index
    %c0_130 = arith.constant 0 : index
    %273 = memref.load %arg4[%c1_129, %c0_130] : memref<4x6xf32, #tpu.memory_space<smem>>
    %274 = vector.broadcast %273 : f32 to vector<1x128xf32>
    %275 = arith.mulf %46, %274 : vector<1x128xf32>
    %c1_131 = arith.constant 1 : index
    %c1_132 = arith.constant 1 : index
    %276 = memref.load %arg4[%c1_131, %c1_132] : memref<4x6xf32, #tpu.memory_space<smem>>
    %277 = vector.broadcast %276 : f32 to vector<1x128xf32>
    %278 = arith.mulf %85, %277 : vector<1x128xf32>
    %279 = arith.addf %275, %278 : vector<1x128xf32>
    %c1_133 = arith.constant 1 : index
    %c2_134 = arith.constant 2 : index
    %280 = memref.load %arg4[%c1_133, %c2_134] : memref<4x6xf32, #tpu.memory_space<smem>>
    %281 = vector.broadcast %280 : f32 to vector<1x128xf32>
    %282 = arith.mulf %124, %281 : vector<1x128xf32>
    %283 = arith.addf %279, %282 : vector<1x128xf32>
    %c1_135 = arith.constant 1 : index
    %c3_136 = arith.constant 3 : index
    %284 = memref.load %arg4[%c1_135, %c3_136] : memref<4x6xf32, #tpu.memory_space<smem>>
    %285 = vector.broadcast %284 : f32 to vector<1x128xf32>
    %286 = arith.mulf %163, %285 : vector<1x128xf32>
    %287 = arith.addf %283, %286 : vector<1x128xf32>
    %c1_137 = arith.constant 1 : index
    %c4_138 = arith.constant 4 : index
    %288 = memref.load %arg4[%c1_137, %c4_138] : memref<4x6xf32, #tpu.memory_space<smem>>
    %289 = vector.broadcast %288 : f32 to vector<1x128xf32>
    %290 = arith.mulf %202, %289 : vector<1x128xf32>
    %291 = arith.addf %287, %290 : vector<1x128xf32>
    %c1_139 = arith.constant 1 : index
    %c5_140 = arith.constant 5 : index
    %292 = memref.load %arg4[%c1_139, %c5_140] : memref<4x6xf32, #tpu.memory_space<smem>>
    %293 = vector.broadcast %292 : f32 to vector<1x128xf32>
    %294 = arith.mulf %241, %293 : vector<1x128xf32>
    %295 = arith.addf %291, %294 : vector<1x128xf32>
    %c1_141 = arith.constant 1 : index
    %296 = memref.load %arg5[%c1_141] : memref<4xf32, #tpu.memory_space<smem>>
    %297 = vector.broadcast %296 : f32 to vector<1x128xf32>
    %298 = arith.addf %295, %297 : vector<1x128xf32>
    %299 = arith.negf %298 : vector<1x128xf32>
    %300 = math.exp %299 : vector<1x128xf32>
    %cst_142 = arith.constant 1.000000e+00 : f32
    %301 = vector.broadcast %cst_142 : f32 to vector<1x128xf32>
    %302 = arith.addf %301, %300 : vector<1x128xf32>
    %303 = arith.divf %301, %302 : vector<1x128xf32>
    %c2_143 = arith.constant 2 : index
    %c0_144 = arith.constant 0 : index
    %304 = memref.load %arg4[%c2_143, %c0_144] : memref<4x6xf32, #tpu.memory_space<smem>>
    %305 = vector.broadcast %304 : f32 to vector<1x128xf32>
    %306 = arith.mulf %46, %305 : vector<1x128xf32>
    %c2_145 = arith.constant 2 : index
    %c1_146 = arith.constant 1 : index
    %307 = memref.load %arg4[%c2_145, %c1_146] : memref<4x6xf32, #tpu.memory_space<smem>>
    %308 = vector.broadcast %307 : f32 to vector<1x128xf32>
    %309 = arith.mulf %85, %308 : vector<1x128xf32>
    %310 = arith.addf %306, %309 : vector<1x128xf32>
    %c2_147 = arith.constant 2 : index
    %c2_148 = arith.constant 2 : index
    %311 = memref.load %arg4[%c2_147, %c2_148] : memref<4x6xf32, #tpu.memory_space<smem>>
    %312 = vector.broadcast %311 : f32 to vector<1x128xf32>
    %313 = arith.mulf %124, %312 : vector<1x128xf32>
    %314 = arith.addf %310, %313 : vector<1x128xf32>
    %c2_149 = arith.constant 2 : index
    %c3_150 = arith.constant 3 : index
    %315 = memref.load %arg4[%c2_149, %c3_150] : memref<4x6xf32, #tpu.memory_space<smem>>
    %316 = vector.broadcast %315 : f32 to vector<1x128xf32>
    %317 = arith.mulf %163, %316 : vector<1x128xf32>
    %318 = arith.addf %314, %317 : vector<1x128xf32>
    %c2_151 = arith.constant 2 : index
    %c4_152 = arith.constant 4 : index
    %319 = memref.load %arg4[%c2_151, %c4_152] : memref<4x6xf32, #tpu.memory_space<smem>>
    %320 = vector.broadcast %319 : f32 to vector<1x128xf32>
    %321 = arith.mulf %202, %320 : vector<1x128xf32>
    %322 = arith.addf %318, %321 : vector<1x128xf32>
    %c2_153 = arith.constant 2 : index
    %c5_154 = arith.constant 5 : index
    %323 = memref.load %arg4[%c2_153, %c5_154] : memref<4x6xf32, #tpu.memory_space<smem>>
    %324 = vector.broadcast %323 : f32 to vector<1x128xf32>
    %325 = arith.mulf %241, %324 : vector<1x128xf32>
    %326 = arith.addf %322, %325 : vector<1x128xf32>
    %c2_155 = arith.constant 2 : index
    %327 = memref.load %arg5[%c2_155] : memref<4xf32, #tpu.memory_space<smem>>
    %328 = vector.broadcast %327 : f32 to vector<1x128xf32>
    %329 = arith.addf %326, %328 : vector<1x128xf32>
    %330 = arith.negf %329 : vector<1x128xf32>
    %331 = math.exp %330 : vector<1x128xf32>
    %cst_156 = arith.constant 1.000000e+00 : f32
    %332 = vector.broadcast %cst_156 : f32 to vector<1x128xf32>
    %333 = arith.addf %332, %331 : vector<1x128xf32>
    %334 = arith.divf %332, %333 : vector<1x128xf32>
    %c3_157 = arith.constant 3 : index
    %c0_158 = arith.constant 0 : index
    %335 = memref.load %arg4[%c3_157, %c0_158] : memref<4x6xf32, #tpu.memory_space<smem>>
    %336 = vector.broadcast %335 : f32 to vector<1x128xf32>
    %337 = arith.mulf %46, %336 : vector<1x128xf32>
    %c3_159 = arith.constant 3 : index
    %c1_160 = arith.constant 1 : index
    %338 = memref.load %arg4[%c3_159, %c1_160] : memref<4x6xf32, #tpu.memory_space<smem>>
    %339 = vector.broadcast %338 : f32 to vector<1x128xf32>
    %340 = arith.mulf %85, %339 : vector<1x128xf32>
    %341 = arith.addf %337, %340 : vector<1x128xf32>
    %c3_161 = arith.constant 3 : index
    %c2_162 = arith.constant 2 : index
    %342 = memref.load %arg4[%c3_161, %c2_162] : memref<4x6xf32, #tpu.memory_space<smem>>
    %343 = vector.broadcast %342 : f32 to vector<1x128xf32>
    %344 = arith.mulf %124, %343 : vector<1x128xf32>
    %345 = arith.addf %341, %344 : vector<1x128xf32>
    %c3_163 = arith.constant 3 : index
    %c3_164 = arith.constant 3 : index
    %346 = memref.load %arg4[%c3_163, %c3_164] : memref<4x6xf32, #tpu.memory_space<smem>>
    %347 = vector.broadcast %346 : f32 to vector<1x128xf32>
    %348 = arith.mulf %163, %347 : vector<1x128xf32>
    %349 = arith.addf %345, %348 : vector<1x128xf32>
    %c3_165 = arith.constant 3 : index
    %c4_166 = arith.constant 4 : index
    %350 = memref.load %arg4[%c3_165, %c4_166] : memref<4x6xf32, #tpu.memory_space<smem>>
    %351 = vector.broadcast %350 : f32 to vector<1x128xf32>
    %352 = arith.mulf %202, %351 : vector<1x128xf32>
    %353 = arith.addf %349, %352 : vector<1x128xf32>
    %c3_167 = arith.constant 3 : index
    %c5_168 = arith.constant 5 : index
    %354 = memref.load %arg4[%c3_167, %c5_168] : memref<4x6xf32, #tpu.memory_space<smem>>
    %355 = vector.broadcast %354 : f32 to vector<1x128xf32>
    %356 = arith.mulf %241, %355 : vector<1x128xf32>
    %357 = arith.addf %353, %356 : vector<1x128xf32>
    %c3_169 = arith.constant 3 : index
    %358 = memref.load %arg5[%c3_169] : memref<4xf32, #tpu.memory_space<smem>>
    %359 = vector.broadcast %358 : f32 to vector<1x128xf32>
    %360 = arith.addf %357, %359 : vector<1x128xf32>
    %361 = arith.negf %360 : vector<1x128xf32>
    %362 = math.exp %361 : vector<1x128xf32>
    %cst_170 = arith.constant 1.000000e+00 : f32
    %363 = vector.broadcast %cst_170 : f32 to vector<1x128xf32>
    %364 = arith.addf %363, %362 : vector<1x128xf32>
    %365 = arith.divf %363, %364 : vector<1x128xf32>
    %c0_171 = arith.constant 0 : index
    %c0_172 = arith.constant 0 : index
    %366 = memref.load %arg6[%c0_171, %c0_172] : memref<1x4xf32, #tpu.memory_space<smem>>
    %367 = vector.broadcast %366 : f32 to vector<1x128xf32>
    %368 = arith.mulf %272, %367 : vector<1x128xf32>
    %c0_173 = arith.constant 0 : index
    %c1_174 = arith.constant 1 : index
    %369 = memref.load %arg6[%c0_173, %c1_174] : memref<1x4xf32, #tpu.memory_space<smem>>
    %370 = vector.broadcast %369 : f32 to vector<1x128xf32>
    %371 = arith.mulf %303, %370 : vector<1x128xf32>
    %372 = arith.addf %368, %371 : vector<1x128xf32>
    %c0_175 = arith.constant 0 : index
    %c2_176 = arith.constant 2 : index
    %373 = memref.load %arg6[%c0_175, %c2_176] : memref<1x4xf32, #tpu.memory_space<smem>>
    %374 = vector.broadcast %373 : f32 to vector<1x128xf32>
    %375 = arith.mulf %334, %374 : vector<1x128xf32>
    %376 = arith.addf %372, %375 : vector<1x128xf32>
    %c0_177 = arith.constant 0 : index
    %c3_178 = arith.constant 3 : index
    %377 = memref.load %arg6[%c0_177, %c3_178] : memref<1x4xf32, #tpu.memory_space<smem>>
    %378 = vector.broadcast %377 : f32 to vector<1x128xf32>
    %379 = arith.mulf %365, %378 : vector<1x128xf32>
    %380 = arith.addf %376, %379 : vector<1x128xf32>
    %c0_179 = arith.constant 0 : index
    %381 = memref.load %arg7[%c0_179] : memref<1xf32, #tpu.memory_space<smem>>
    %382 = vector.broadcast %381 : f32 to vector<1x128xf32>
    %383 = arith.addf %380, %382 : vector<1x128xf32>
    %384 = arith.negf %383 : vector<1x128xf32>
    %385 = math.exp %384 : vector<1x128xf32>
    %cst_180 = arith.constant 1.000000e+00 : f32
    %386 = vector.broadcast %cst_180 : f32 to vector<1x128xf32>
    %387 = arith.addf %386, %385 : vector<1x128xf32>
    %388 = arith.divf %386, %387 : vector<1x128xf32>
    %c0_181 = arith.constant 0 : index
    %c0_182 = arith.constant 0 : index
    %389 = vector.load %arg8[%c0_181, %c0_182] : memref<1x128xf32, #tpu.memory_space<vmem>>, vector<1x128xf32>
    tpu.vector_store %arg8[%c0_181, %c0_182], %388 {strides = array<i32>} : memref<1x128xf32, #tpu.memory_space<vmem>>, vector<1x128xf32>,
    return
  }
  func.func @transform_0(%arg0: i32) -> (i32, i32) {
    %c0_i32 = arith.constant 0 : i32
    %c0_i32_0 = arith.constant 0 : i32
    return %c0_i32, %arg0 : i32, i32
  }
  func.func @transform_1(%arg0: i32) -> (i32, i32) {
    %c0_i32 = arith.constant 0 : i32
    %c0_i32_0 = arith.constant 0 : i32
    %c0_i32_1 = arith.constant 0 : i32
    return %c0_i32, %c0_i32_0 : i32, i32
  }
  func.func @transform_2(%arg0: i32) -> i32 {
    %c0_i32 = arith.constant 0 : i32
    %c0_i32_0 = arith.constant 0 : i32
    return %c0_i32 : i32
  }
  func.func @transform_3(%arg0: i32) -> (i32, i32) {
    %c0_i32 = arith.constant 0 : i32
    %c0_i32_0 = arith.constant 0 : i32
    %c0_i32_1 = arith.constant 0 : i32
    return %c0_i32, %c0_i32_0 : i32, i32
  }
  func.func @transform_4(%arg0: i32) -> i32 {
    %c0_i32 = arith.constant 0 : i32
    %c0_i32_0 = arith.constant 0 : i32
    return %c0_i32 : i32
  }
  func.func @transform_5(%arg0: i32) -> (i32, i32) {
    %c0_i32 = arith.constant 0 : i32
    %c0_i32_0 = arith.constant 0 : i32
    %c0_i32_1 = arith.constant 0 : i32
    return %c0_i32, %c0_i32_0 : i32, i32
  }
  func.func @transform_6(%arg0: i32) -> i32 {
    %c0_i32 = arith.constant 0 : i32
    %c0_i32_0 = arith.constant 0 : i32
    return %c0_i32 : i32
  }
  func.func @transform_7(%arg0: i32) -> (i32, i32) {
    %c0_i32 = arith.constant 0 : i32
    %c0_i32_0 = arith.constant 0 : i32
    return %c0_i32, %arg0 : i32, i32
  }
}

</mosaic_0001>

<llo_original>
// kernel: tpu_custom_call.1
$region0: #{tpu_custom_call.1}
  #allocation0 [shape = 'u32[]', space=smem, size = 0x4, offset = 0x4, fixed_abs, tag = 'smem constant byte address 0x4 - core index']
  #allocation1 [shape = 'u32[144,128]{1,0:T(1,128)}', space=vmem, size = 0x12000, scoped, tag = 'internal scratch']
  #allocation2 [shape = 'f32[1]{0:T(128)S(6)}', space=smem, size = 0x200, scoped, tag = 'scoped memory for tpu_custom_call.1']
  %s0 = inlined_call_operand.hbm [shape: f32[8,128], index: 0, kind: input, shape index: {}]
  %s1 = inlined_call_operand.hbm [shape: f32[6,8], index: 1, kind: input, shape index: {}]
  %s2 = inlined_call_operand.vmem [shape: f32[6], index: 2, kind: input, shape index: {}]
  %s3 = inlined_call_operand.vmem [shape: f32[4,6], index: 3, kind: input, shape index: {}]
  %s4 = inlined_call_operand.vmem [shape: f32[4], index: 4, kind: input, shape index: {}]
  %s5 = inlined_call_operand.vmem [shape: f32[1,4], index: 5, kind: input, shape index: {}]
  %s6 = inlined_call_operand.<no memory space> [shape: f32[1], index: 6, kind: input, shape index: {}]
  %s7 = inlined_call_operand.hbm [shape: f32[1,128], index: 7, kind: output, shape index: {}]
  %s8 = sld [smem:[#allocation0]]
  $region62: #{tpu_custom_call.1} parent=0
    _
  %s10 = ssub.s32 1, %s8
  %s11 = scalar_select 0, %s10, %s8
  %12 = sst [smem:[#allocation2]] %s6
  $region1: #{tpu_custom_call.1} parent=0
    #allocation3 [shape = 'u8[4096]{0}', space=vmem, size = 0x1000, scoped, tag = 'input window, operand 0, single buffered']
    #allocation4 [shape = 's32[1]{0}', space=sflag, size = 0x4, scoped, tag = 'scoped memory for tpu_custom_call.1']
    #allocation5 [shape = 's32[1]{0}', space=sflag, size = 0x4, scoped, tag = 'scoped memory for tpu_custom_call.1']
    #allocation6 [shape = 's32[1]{0}', space=sflag, size = 0x4, scoped, tag = 'scoped memory for tpu_custom_call.1']
    #allocation7 [shape = 's32[1]{0}', space=sflag, size = 0x4, scoped, tag = 'scoped memory for tpu_custom_call.1']
    #allocation8 [shape = 'u8[4096]{0}', space=smem, size = 0x1000, scoped, tag = 'input window, operand 1, single buffered']
    #allocation9 [shape = 'u8[512]{0}', space=smem, size = 0x200, scoped, tag = 'input window, operand 2, single buffered']
    #allocation10 [shape = 'u8[2048]{0}', space=smem, size = 0x800, scoped, tag = 'input window, operand 3, single buffered']
    #allocation11 [shape = 's32[1]{0}', space=sflag, size = 0x4, scoped, tag = 'scoped memory for tpu_custom_call.1']
    #allocation12 [shape = 'u8[512]{0}', space=smem, size = 0x200, scoped, tag = 'input window, operand 4, single buffered']
    #allocation13 [shape = 'u8[512]{0}', space=smem, size = 0x200, scoped, tag = 'input window, operand 5, single buffered']
    #allocation14 [shape = 's32[1]{0}', space=sflag, size = 0x4, scoped, tag = 'scoped memory for tpu_custom_call.1']
    #allocation15 [shape = 'u8[512]{0}', space=vmem, size = 0x400, scoped, tag = 'output window, operand 0, single buffered']
    %13 = vsyncpa [#allocation4], 0
    %14 = vsyncpa [#allocation6], 0
    %15 = vsyncpa [#allocation7], 0
    %16 = vsyncpa [#allocation11], 0
    %17 = vsyncpa [#allocation14], 0
    %18 = vsyncpa [#allocation5], 0
    // Predicated region
    $region2: #{tpu_custom_call.1} parent=1 // pred_check
      _
    $region3: #{tpu_custom_call.1} parent=1 // pred_check_branch
      %20 = sbr.rel (0) target = $region5
    $region4: #{tpu_custom_call.1} parent=1 // pred_region
      %s22 = ssub.s32 128, 128
      %23 = vsyncadd [#allocation4], %s22
      %s25 = sshll.u32 [#allocation3], 4
      %s26 = int_to_ptr.vmem [resolvable:$true] %s25
      %28 = dma.hbm_to_vmem [thread:$0]  %s0, 128, %s26, [#allocation4]
    $region5: #{tpu_custom_call.1} parent=1 // pred_fallthru
      _
    // Predicated region
    $region6: #{tpu_custom_call.1} parent=1 // pred_check
      _
    $region7: #{tpu_custom_call.1} parent=1 // pred_check_branch
      %30 = sbr.rel (0) target = $region9
    $region8: #{tpu_custom_call.1} parent=1 // pred_region
      %s32 = ssub.s32 128, 128
      %33 = vsyncadd [#allocation6], %s32
      %36 = dma.hbm_to_smem %s1, 128, [#allocation8], [#allocation6]
    $region9: #{tpu_custom_call.1} parent=1 // pred_fallthru
      _
    // Predicated region
    $region10: #{tpu_custom_call.1} parent=1 // pred_check
      _
    $region11: #{tpu_custom_call.1} parent=1 // pred_check_branch
      %38 = sbr.rel (0) target = $region13
    $region12: #{tpu_custom_call.1} parent=1 // pred_region
      %s40 = ssub.s32 16, 16
      %41 = vsyncadd [#allocation7], %s40
      %s43 = sshll.u32 %s2, 4
      %s44 = int_to_ptr.vmem [resolvable:$true] %s43
      %46 = dma.vmem_to_smem %s44, 16, [#allocation9], [#allocation7]
    $region13: #{tpu_custom_call.1} parent=1 // pred_fallthru
      _
    // Predicated region
    $region14: #{tpu_custom_call.1} parent=1 // pred_check
      _
    $region15: #{tpu_custom_call.1} parent=1 // pred_check_branch
      %48 = sbr.rel (0) target = $region17
    $region16: #{tpu_custom_call.1} parent=1 // pred_region
      %s50 = ssub.s32 64, 64
      %51 = vsyncadd [#allocation11], %s50
      %s53 = sshll.u32 %s3, 4
      %s54 = int_to_ptr.vmem [resolvable:$true] %s53
      %56 = dma.vmem_to_smem %s54, 64, [#allocation10], [#allocation11]
    $region17: #{tpu_custom_call.1} parent=1 // pred_fallthru
      _
    // Predicated region
    $region18: #{tpu_custom_call.1} parent=1 // pred_check
      _
    $region19: #{tpu_custom_call.1} parent=1 // pred_check_branch
      %58 = sbr.rel (0) target = $region21
    $region20: #{tpu_custom_call.1} parent=1 // pred_region
      %s60 = ssub.s32 16, 16
      %61 = vsyncadd [#allocation11], %s60
      %s63 = sshll.u32 %s4, 4
      %s64 = int_to_ptr.vmem [resolvable:$true] %s63
      %66 = dma.vmem_to_smem %s64, 16, [#allocation12], [#allocation11]
    $region21: #{tpu_custom_call.1} parent=1 // pred_fallthru
      _
    // Predicated region
    $region22: #{tpu_custom_call.1} parent=1 // pred_check
      _
    $region23: #{tpu_custom_call.1} parent=1 // pred_check_branch
      %68 = sbr.rel (0) target = $region25
    $region24: #{tpu_custom_call.1} parent=1 // pred_region
      %s70 = ssub.s32 16, 16
      %71 = vsyncadd [#allocation14], %s70
      %s73 = sshll.u32 %s5, 4
      %s74 = int_to_ptr.vmem [resolvable:$true] %s73
      %76 = dma.vmem_to_smem %s74, 16, [#allocation13], [#allocation14]
    $region25: #{tpu_custom_call.1} parent=1 // pred_fallthru
      _
    // Predicated region
    $region26: #{tpu_custom_call.1} parent=1 // pred_check
      _
    $region27: #{tpu_custom_call.1} parent=1 // pred_check_branch
      %78 = sbr.rel (0) target = $region29
    $region28: #{tpu_custom_call.1} parent=1 // pred_region
      _
    $region29: #{tpu_custom_call.1} parent=1 // pred_fallthru
      _
    // Predicated region
    $region30: #{tpu_custom_call.1} parent=1 // pred_check
      _
    $region31: #{tpu_custom_call.1} parent=1 // pred_check_branch
      %80 = sbr.rel (0) target = $region33
    $region32: #{tpu_custom_call.1} parent=1 // pred_region
      %81 = dma.done [#allocation4], 128
    $region33: #{tpu_custom_call.1} parent=1 // pred_fallthru
      _
    // Predicated region
    $region34: #{tpu_custom_call.1} parent=1 // pred_check
      _
    $region35: #{tpu_custom_call.1} parent=1 // pred_check_branch
      %83 = sbr.rel (0) target = $region37
    $region36: #{tpu_custom_call.1} parent=1 // pred_region
      %84 = dma.done [#allocation6], 128
    $region37: #{tpu_custom_call.1} parent=1 // pred_fallthru
      _
    // Predicated region
    $region38: #{tpu_custom_call.1} parent=1 // pred_check
      _
    $region39: #{tpu_custom_call.1} parent=1 // pred_check_branch
      %86 = sbr.rel (0) target = $region41
    $region40: #{tpu_custom_call.1} parent=1 // pred_region
      %87 = dma.done [#allocation7], 16
    $region41: #{tpu_custom_call.1} parent=1 // pred_fallthru
      _
    // Predicated region
    $region42: #{tpu_custom_call.1} parent=1 // pred_check
      _
    $region43: #{tpu_custom_call.1} parent=1 // pred_check_branch
      %89 = sbr.rel (0) target = $region45
    $region44: #{tpu_custom_call.1} parent=1 // pred_region
      %90 = dma.done [#allocation11], 64
    $region45: #{tpu_custom_call.1} parent=1 // pred_fallthru
      _
    // Predicated region
    $region46: #{tpu_custom_call.1} parent=1 // pred_check
      _
    $region47: #{tpu_custom_call.1} parent=1 // pred_check_branch
      %92 = sbr.rel (0) target = $region49
    $region48: #{tpu_custom_call.1} parent=1 // pred_region
      %93 = dma.done [#allocation11], 16
    $region49: #{tpu_custom_call.1} parent=1 // pred_fallthru
      _
    // Predicated region
    $region50: #{tpu_custom_call.1} parent=1 // pred_check
      _
    $region51: #{tpu_custom_call.1} parent=1 // pred_check_branch
      %95 = sbr.rel (0) target = $region53
    $region52: #{tpu_custom_call.1} parent=1 // pred_region
      %96 = dma.done [#allocation14], 16
    $region53: #{tpu_custom_call.1} parent=1 // pred_fallthru
      _
    %97 = sfence
    %v98 = vld [vmem:[#allocation3] sm:$0x1]
    %v99 = vld [vmem:[#allocation3 + $0x1] sm:$0x1]
    %v100 = vld [vmem:[#allocation3 + $0x2] sm:$0x1]
    %v101 = vld [vmem:[#allocation3 + $0x3] sm:$0x1]
    %v102 = vld [vmem:[#allocation3 + $0x4] sm:$0x1]
    %v103 = vld [vmem:[#allocation3 + $0x5] sm:$0x1]
    %v104 = vld [vmem:[#allocation3 + $0x6] sm:$0x1]
    %v105 = vld [vmem:[#allocation3 + $0x7] sm:$0x1]
    %s106 = sld [smem:[#allocation8]]
    %v107 = vstv %s106
    %v108 = vmul.f32 %v98, %v107
    %s109 = sld [smem:[#allocation8 + $0x1]]
    %v110 = vstv %s109
    %v111 = vmul.f32 %v99, %v110
    %v112 = vadd.f32 %v108, %v111
    %s113 = sld [smem:[#allocation8 + $0x2]]
    %v114 = vstv %s113
    %v115 = vmul.f32 %v100, %v114
    %v116 = vadd.f32 %v112, %v115
    %s117 = sld [smem:[#allocation8 + $0x3]]
    %v118 = vstv %s117
    %v119 = vmul.f32 %v101, %v118
    %v120 = vadd.f32 %v116, %v119
    %s121 = sld [smem:[#allocation8 + $0x4]]
    %v122 = vstv %s121
    %v123 = vmul.f32 %v102, %v122
    %v124 = vadd.f32 %v120, %v123
    %s125 = sld [smem:[#allocation8 + $0x5]]
    %v126 = vstv %s125
    %v127 = vmul.f32 %v103, %v126
    %v128 = vadd.f32 %v124, %v127
    %s129 = sld [smem:[#allocation8 + $0x6]]
    %v130 = vstv %s129
    %v131 = vmul.f32 %v104, %v130
    %v132 = vadd.f32 %v128, %v131
    %s133 = sld [smem:[#allocation8 + $0x7]]
    %v134 = vstv %s133
    %v135 = vmul.f32 %v105, %v134
    %v136 = vadd.f32 %v132, %v135
    %s137 = sld [smem:[#allocation9]]
    %v138 = vstv %s137
    %v139 = vadd.f32 %v136, %v138
    %v140 = vxor.u32 %v139, 2147483648
    %v141 = vmul.f32 %v140, 1.442695
    %v142 = vpow.pop %v141
    %v143 = vadd.f32 %v142, 1.0
    %v144 = vrcp.pop %v143
    %v145 = vmul.f32 1.0, %v144
    %s146 = sld [smem:[#allocation8 + $0x80]]
    %v147 = vstv %s146
    %v148 = vmul.f32 %v98, %v147
    %s149 = sld [smem:[#allocation8 + $0x81]]
    %v150 = vstv %s149
    %v151 = vmul.f32 %v99, %v150
    %v152 = vadd.f32 %v148, %v151
    %s153 = sld [smem:[#allocation8 + $0x82]]
    %v154 = vstv %s153
    %v155 = vmul.f32 %v100, %v154
    %v156 = vadd.f32 %v152, %v155
    %s157 = sld [smem:[#allocation8 + $0x83]]
    %v158 = vstv %s157
    %v159 = vmul.f32 %v101, %v158
    %v160 = vadd.f32 %v156, %v159
    %s161 = sld [smem:[#allocation8 + $0x84]]
    %v162 = vstv %s161
    %v163 = vmul.f32 %v102, %v162
    %v164 = vadd.f32 %v160, %v163
    %s165 = sld [smem:[#allocation8 + $0x85]]
    %v166 = vstv %s165
    %v167 = vmul.f32 %v103, %v166
    %v168 = vadd.f32 %v164, %v167
    %s169 = sld [smem:[#allocation8 + $0x86]]
    %v170 = vstv %s169
    %v171 = vmul.f32 %v104, %v170
    %v172 = vadd.f32 %v168, %v171
    %s173 = sld [smem:[#allocation8 + $0x87]]
    %v174 = vstv %s173
    %v175 = vmul.f32 %v105, %v174
    %v176 = vadd.f32 %v172, %v175
    %s177 = sld [smem:[#allocation9 + $0x1]]
    %v178 = vstv %s177
    %v179 = vadd.f32 %v176, %v178
    %v180 = vxor.u32 %v179, 2147483648
    %v181 = vmul.f32 %v180, 1.442695
    %v182 = vpow.pop %v181
    %v183 = vadd.f32 %v182, 1.0
    %v184 = vrcp.pop %v183
    %v185 = vmul.f32 1.0, %v184
    %s186 = sld [smem:[#allocation8 + $0x100]]
    %v187 = vstv %s186
    %v188 = vmul.f32 %v98, %v187
    %s189 = sld [smem:[#allocation8 + $0x101]]
    %v190 = vstv %s189
    %v191 = vmul.f32 %v99, %v190
    %v192 = vadd.f32 %v188, %v191
    %s193 = sld [smem:[#allocation8 + $0x102]]
    %v194 = vstv %s193
    %v195 = vmul.f32 %v100, %v194
    %v196 = vadd.f32 %v192, %v195
    %s197 = sld [smem:[#allocation8 + $0x103]]
    %v198 = vstv %s197
    %v199 = vmul.f32 %v101, %v198
    %v200 = vadd.f32 %v196, %v199
    %s201 = sld [smem:[#allocation8 + $0x104]]
    %v202 = vstv %s201
    %v203 = vmul.f32 %v102, %v202
    %v204 = vadd.f32 %v200, %v203
    %s205 = sld [smem:[#allocation8 + $0x105]]
    %v206 = vstv %s205
    %v207 = vmul.f32 %v103, %v206
    %v208 = vadd.f32 %v204, %v207
    %s209 = sld [smem:[#allocation8 + $0x106]]
    %v210 = vstv %s209
    %v211 = vmul.f32 %v104, %v210
    %v212 = vadd.f32 %v208, %v211
    %s213 = sld [smem:[#allocation8 + $0x107]]
    %v214 = vstv %s213
    %v215 = vmul.f32 %v105, %v214
    %v216 = vadd.f32 %v212, %v215
    %s217 = sld [smem:[#allocation9 + $0x2]]
    %v218 = vstv %s217
    %v219 = vadd.f32 %v216, %v218
    %v220 = vxor.u32 %v219, 2147483648
    %v221 = vmul.f32 %v220, 1.442695
    %v222 = vpow.pop %v221
    %v223 = vadd.f32 %v222, 1.0
    %v224 = vrcp.pop %v223
    %v225 = vmul.f32 1.0, %v224
    %s226 = sld [smem:[#allocation8 + $0x180]]
    %v227 = vstv %s226
    %v228 = vmul.f32 %v98, %v227
    %s229 = sld [smem:[#allocation8 + $0x181]]
    %v230 = vstv %s229
    %v231 = vmul.f32 %v99, %v230
    %v232 = vadd.f32 %v228, %v231
    %s233 = sld [smem:[#allocation8 + $0x182]]
    %v234 = vstv %s233
    %v235 = vmul.f32 %v100, %v234
    %v236 = vadd.f32 %v232, %v235
    %s237 = sld [smem:[#allocation8 + $0x183]]
    %v238 = vstv %s237
    %v239 = vmul.f32 %v101, %v238
    %v240 = vadd.f32 %v236, %v239
    %s241 = sld [smem:[#allocation8 + $0x184]]
    %v242 = vstv %s241
    %v243 = vmul.f32 %v102, %v242
    %v244 = vadd.f32 %v240, %v243
    %s245 = sld [smem:[#allocation8 + $0x185]]
    %v246 = vstv %s245
    %v247 = vmul.f32 %v103, %v246
    %v248 = vadd.f32 %v244, %v247
    %s249 = sld [smem:[#allocation8 + $0x186]]
    %v250 = vstv %s249
    %v251 = vmul.f32 %v104, %v250
    %v252 = vadd.f32 %v248, %v251
    %s253 = sld [smem:[#allocation8 + $0x187]]
    %v254 = vstv %s253
    %v255 = vmul.f32 %v105, %v254
    %v256 = vadd.f32 %v252, %v255
    %s257 = sld [smem:[#allocation9 + $0x3]]
    %v258 = vstv %s257
    %v259 = vadd.f32 %v256, %v258
    %v260 = vxor.u32 %v259, 2147483648
    %v261 = vmul.f32 %v260, 1.442695
    %v262 = vpow.pop %v261
    %v263 = vadd.f32 %v262, 1.0
    %v264 = vrcp.pop %v263
    %v265 = vmul.f32 1.0, %v264
    %s266 = sld [smem:[#allocation8 + $0x200]]
    %v267 = vstv %s266
    %v268 = vmul.f32 %v98, %v267
    %s269 = sld [smem:[#allocation8 + $0x201]]
    %v270 = vstv %s269
    %v271 = vmul.f32 %v99, %v270
    %v272 = vadd.f32 %v268, %v271
    %s273 = sld [smem:[#allocation8 + $0x202]]
    %v274 = vstv %s273
    %v275 = vmul.f32 %v100, %v274
    %v276 = vadd.f32 %v272, %v275
    %s277 = sld [smem:[#allocation8 + $0x203]]
    %v278 = vstv %s277
    %v279 = vmul.f32 %v101, %v278
    %v280 = vadd.f32 %v276, %v279
    %s281 = sld [smem:[#allocation8 + $0x204]]
    %v282 = vstv %s281
    %v283 = vmul.f32 %v102, %v282
    %v284 = vadd.f32 %v280, %v283
    %s285 = sld [smem:[#allocation8 + $0x205]]
    %v286 = vstv %s285
    %v287 = vmul.f32 %v103, %v286
    %v288 = vadd.f32 %v284, %v287
    %s289 = sld [smem:[#allocation8 + $0x206]]
    %v290 = vstv %s289
    %v291 = vmul.f32 %v104, %v290
    %v292 = vadd.f32 %v288, %v291
    %s293 = sld [smem:[#allocation8 + $0x207]]
    %v294 = vstv %s293
    %v295 = vmul.f32 %v105, %v294
    %v296 = vadd.f32 %v292, %v295
    %s297 = sld [smem:[#allocation9 + $0x4]]
    %v298 = vstv %s297
    %v299 = vadd.f32 %v296, %v298
    %v300 = vxor.u32 %v299, 2147483648
    %v301 = vmul.f32 %v300, 1.442695
    %v302 = vpow.pop %v301
    %v303 = vadd.f32 %v302, 1.0
    %v304 = vrcp.pop %v303
    %v305 = vmul.f32 1.0, %v304
    %s306 = sld [smem:[#allocation8 + $0x280]]
    %v307 = vstv %s306
    %v308 = vmul.f32 %v98, %v307
    %s309 = sld [smem:[#allocation8 + $0x281]]
    %v310 = vstv %s309
    %v311 = vmul.f32 %v99, %v310
    %v312 = vadd.f32 %v308, %v311
    %s313 = sld [smem:[#allocation8 + $0x282]]
    %v314 = vstv %s313
    %v315 = vmul.f32 %v100, %v314
    %v316 = vadd.f32 %v312, %v315
    %s317 = sld [smem:[#allocation8 + $0x283]]
    %v318 = vstv %s317
    %v319 = vmul.f32 %v101, %v318
    %v320 = vadd.f32 %v316, %v319
    %s321 = sld [smem:[#allocation8 + $0x284]]
    %v322 = vstv %s321
    %v323 = vmul.f32 %v102, %v322
    %v324 = vadd.f32 %v320, %v323
    %s325 = sld [smem:[#allocation8 + $0x285]]
    %v326 = vstv %s325
    %v327 = vmul.f32 %v103, %v326
    %v328 = vadd.f32 %v324, %v327
    %s329 = sld [smem:[#allocation8 + $0x286]]
    %v330 = vstv %s329
    %v331 = vmul.f32 %v104, %v330
    %v332 = vadd.f32 %v328, %v331
    %s333 = sld [smem:[#allocation8 + $0x287]]
    %v334 = vstv %s333
    %v335 = vmul.f32 %v105, %v334
    %v336 = vadd.f32 %v332, %v335
    %s337 = sld [smem:[#allocation9 + $0x5]]
    %v338 = vstv %s337
    %v339 = vadd.f32 %v336, %v338
    %v340 = vxor.u32 %v339, 2147483648
    %v341 = vmul.f32 %v340, 1.442695
    %v342 = vpow.pop %v341
    %v343 = vadd.f32 %v342, 1.0
    %v344 = vrcp.pop %v343
    %v345 = vmul.f32 1.0, %v344
    %s346 = sld [smem:[#allocation10]]
    %v347 = vstv %s346
    %v348 = vmul.f32 %v145, %v347
    %s349 = sld [smem:[#allocation10 + $0x1]]
    %v350 = vstv %s349
    %v351 = vmul.f32 %v185, %v350
    %v352 = vadd.f32 %v348, %v351
    %s353 = sld [smem:[#allocation10 + $0x2]]
    %v354 = vstv %s353
    %v355 = vmul.f32 %v225, %v354
    %v356 = vadd.f32 %v352, %v355
    %s357 = sld [smem:[#allocation10 + $0x3]]
    %v358 = vstv %s357
    %v359 = vmul.f32 %v265, %v358
    %v360 = vadd.f32 %v356, %v359
    %s361 = sld [smem:[#allocation10 + $0x4]]
    %v362 = vstv %s361
    %v363 = vmul.f32 %v305, %v362
    %v364 = vadd.f32 %v360, %v363
    %s365 = sld [smem:[#allocation10 + $0x5]]
    %v366 = vstv %s365
    %v367 = vmul.f32 %v345, %v366
    %v368 = vadd.f32 %v364, %v367
    %s369 = sld [smem:[#allocation12]]
    %v370 = vstv %s369
    %v371 = vadd.f32 %v368, %v370
    %v372 = vxor.u32 %v371, 2147483648
    %v373 = vmul.f32 %v372, 1.442695
    %v374 = vpow.pop %v373
    %v375 = vadd.f32 %v374, 1.0
    %v376 = vrcp.pop %v375
    %v377 = vmul.f32 1.0, %v376
    %s378 = sld [smem:[#allocation10 + $0x80]]
    %v379 = vstv %s378
    %v380 = vmul.f32 %v145, %v379
    %s381 = sld [smem:[#allocation10 + $0x81]]
    %v382 = vstv %s381
    %v383 = vmul.f32 %v185, %v382
    %v384 = vadd.f32 %v380, %v383
    %s385 = sld [smem:[#allocation10 + $0x82]]
    %v386 = vstv %s385
    %v387 = vmul.f32 %v225, %v386
    %v388 = vadd.f32 %v384, %v387
    %s389 = sld [smem:[#allocation10 + $0x83]]
    %v390 = vstv %s389
    %v391 = vmul.f32 %v265, %v390
    %v392 = vadd.f32 %v388, %v391
    %s393 = sld [smem:[#allocation10 + $0x84]]
    %v394 = vstv %s393
    %v395 = vmul.f32 %v305, %v394
    %v396 = vadd.f32 %v392, %v395
    %s397 = sld [smem:[#allocation10 + $0x85]]
    %v398 = vstv %s397
    %v399 = vmul.f32 %v345, %v398
    %v400 = vadd.f32 %v396, %v399
    %s401 = sld [smem:[#allocation12 + $0x1]]
    %v402 = vstv %s401
    %v403 = vadd.f32 %v400, %v402
    %v404 = vxor.u32 %v403, 2147483648
    %v405 = vmul.f32 %v404, 1.442695
    %v406 = vpow.pop %v405
    %v407 = vadd.f32 %v406, 1.0
    %v408 = vrcp.pop %v407
    %v409 = vmul.f32 1.0, %v408
    %s410 = sld [smem:[#allocation10 + $0x100]]
    %v411 = vstv %s410
    %v412 = vmul.f32 %v145, %v411
    %s413 = sld [smem:[#allocation10 + $0x101]]
    %v414 = vstv %s413
    %v415 = vmul.f32 %v185, %v414
    %v416 = vadd.f32 %v412, %v415
    %s417 = sld [smem:[#allocation10 + $0x102]]
    %v418 = vstv %s417
    %v419 = vmul.f32 %v225, %v418
    %v420 = vadd.f32 %v416, %v419
    %s421 = sld [smem:[#allocation10 + $0x103]]
    %v422 = vstv %s421
    %v423 = vmul.f32 %v265, %v422
    %v424 = vadd.f32 %v420, %v423
    %s425 = sld [smem:[#allocation10 + $0x104]]
    %v426 = vstv %s425
    %v427 = vmul.f32 %v305, %v426
    %v428 = vadd.f32 %v424, %v427
    %s429 = sld [smem:[#allocation10 + $0x105]]
    %v430 = vstv %s429
    %v431 = vmul.f32 %v345, %v430
    %v432 = vadd.f32 %v428, %v431
    %s433 = sld [smem:[#allocation12 + $0x2]]
    %v434 = vstv %s433
    %v435 = vadd.f32 %v432, %v434
    %v436 = vxor.u32 %v435, 2147483648
    %v437 = vmul.f32 %v436, 1.442695
    %v438 = vpow.pop %v437
    %v439 = vadd.f32 %v438, 1.0
    %v440 = vrcp.pop %v439
    %v441 = vmul.f32 1.0, %v440
    %s442 = sld [smem:[#allocation10 + $0x180]]
    %v443 = vstv %s442
    %v444 = vmul.f32 %v145, %v443
    %s445 = sld [smem:[#allocation10 + $0x181]]
    %v446 = vstv %s445
    %v447 = vmul.f32 %v185, %v446
    %v448 = vadd.f32 %v444, %v447
    %s449 = sld [smem:[#allocation10 + $0x182]]
    %v450 = vstv %s449
    %v451 = vmul.f32 %v225, %v450
    %v452 = vadd.f32 %v448, %v451
    %s453 = sld [smem:[#allocation10 + $0x183]]
    %v454 = vstv %s453
    %v455 = vmul.f32 %v265, %v454
    %v456 = vadd.f32 %v452, %v455
    %s457 = sld [smem:[#allocation10 + $0x184]]
    %v458 = vstv %s457
    %v459 = vmul.f32 %v305, %v458
    %v460 = vadd.f32 %v456, %v459
    %s461 = sld [smem:[#allocation10 + $0x185]]
    %v462 = vstv %s461
    %v463 = vmul.f32 %v345, %v462
    %v464 = vadd.f32 %v460, %v463
    %s465 = sld [smem:[#allocation12 + $0x3]]
    %v466 = vstv %s465
    %v467 = vadd.f32 %v464, %v466
    %v468 = vxor.u32 %v467, 2147483648
    %v469 = vmul.f32 %v468, 1.442695
    %v470 = vpow.pop %v469
    %v471 = vadd.f32 %v470, 1.0
    %v472 = vrcp.pop %v471
    %v473 = vmul.f32 1.0, %v472
    %s474 = sld [smem:[#allocation13]]
    %v475 = vstv %s474
    %v476 = vmul.f32 %v377, %v475
    %s477 = sld [smem:[#allocation13 + $0x1]]
    %v478 = vstv %s477
    %v479 = vmul.f32 %v409, %v478
    %v480 = vadd.f32 %v476, %v479
    %s481 = sld [smem:[#allocation13 + $0x2]]
    %v482 = vstv %s481
    %v483 = vmul.f32 %v441, %v482
    %v484 = vadd.f32 %v480, %v483
    %s485 = sld [smem:[#allocation13 + $0x3]]
    %v486 = vstv %s485
    %v487 = vmul.f32 %v473, %v486
    %v488 = vadd.f32 %v484, %v487
    %s489 = sld [smem:[#allocation2]]
    %v490 = vstv %s489
    %v491 = vadd.f32 %v488, %v490
    %v492 = vxor.u32 %v491, 2147483648
    %v493 = vmul.f32 %v492, 1.442695
    %v494 = vpow.pop %v493
    %v495 = vadd.f32 %v494, 1.0
    %v496 = vrcp.pop %v495
    %v497 = vmul.f32 1.0, %v496
    %498 = vst [vmem:[#allocation15] sm:$0x1] %v497
    // Predicated region
    $region54: #{tpu_custom_call.1} parent=1 // pred_check
      _
    $region55: #{tpu_custom_call.1} parent=1 // pred_check_branch
      %500 = sbr.rel (0) target = $region57
    $region56: #{tpu_custom_call.1} parent=1 // pred_region
      %s502 = ssub.s32 16, 16
      %503 = vsyncadd [#allocation5], %s502
      %s505 = sshll.u32 [#allocation15], 4
      %s506 = int_to_ptr.vmem [resolvable:$true] %s505
      %508 = dma.vmem_to_hbm [thread:$0]  %s506, 16, %s7, [#allocation5]
    $region57: #{tpu_custom_call.1} parent=1 // pred_fallthru
      _
    // Predicated region
    $region58: #{tpu_custom_call.1} parent=1 // pred_check
      _
    $region59: #{tpu_custom_call.1} parent=1 // pred_check_branch
      %510 = sbr.rel (0) target = $region61
    $region60: #{tpu_custom_call.1} parent=1 // pred_region
      %511 = dma.done [#allocation5], 16
    $region61: #{tpu_custom_call.1} parent=1 // pred_fallthru
      _
    %512 = vsyncpa [#allocation4], 1
    %513 = vsyncpa [#allocation5], 1
    %514 = vsyncpa [#allocation6], 1
    %515 = vsyncpa [#allocation7], 1
    %516 = vsyncpa [#allocation11], 1
    %517 = vsyncpa [#allocation14], 1

</llo_original>
